<compile_context>
chip_gen: v7x
topology: tpu7x:2x2x1
jax: 0.10.0
libtpu: 0.0.40
codegen_flags: <defaults>
</compile_context>

<pallas_src>
import jax
import jax.numpy as jnp
import numpy as np
from jax.experimental import pallas as pl
from jax.experimental.pallas import tpu as pltpu

DT = 0.05
L = 3.0
DT_OVER_L = DT / L        # constant-folded: avoids an in-kernel divide
N_STATE = 5
N_CTRL = 2
MAX_TILE = 512            # batch lanes per grid step (multiple of 128)


def _kbicycle_kernel(x_ref, u_ref, out_ref):
    # x_ref: (5, T)  rows = [px, py, cos_th, sin_th, v]
    # u_ref: (2, T)  rows = [accel, steering_angle]
    px = x_ref[0:1, :]
    py = x_ref[1:2, :]
    cos_th = x_ref[2:3, :]
    sin_th = x_ref[3:4, :]
    v = x_ref[4:5, :]

    a = u_ref[0:1, :]
    steer = u_ref[1:2, :]

    # Normalize (cos_th, sin_th): exactly reproduces cos/sin(atan2(sin, cos))
    # without computing atan2 (one sqrt + divide instead of atan2 + 2 trig).
    # The max() only guards padded lanes (real states are ~unit-norm).
    norm_sq = cos_th * cos_th + sin_th * sin_th
    inv_norm = 1.0 / jnp.sqrt(jnp.maximum(norm_sq, 1e-30))
    cos_n = cos_th * inv_norm
    sin_n = sin_th * inv_norm

    v_dt = v * DT
    px_new = px + v_dt * cos_n
    py_new = py + v_dt * sin_n

    # tan via sin/cos (EUP ops; exact divide keeps full f32 accuracy).
    tan_steer = jnp.sin(steer) / jnp.cos(steer)
    dth = v * tan_steer * DT_OVER_L

    # Angle-addition identity: new heading's cos/sin without recomputing
    # cos/sin of the full heading angle.
    cos_d = jnp.cos(dth)
    sin_d = jnp.sin(dth)
    cos_new = cos_n * cos_d - sin_n * sin_d
    sin_new = sin_n * cos_d + cos_n * sin_d

    v_new = v + a * DT

    # Lane-dense row stores (unmasked along the 128-lane axis).
    out_ref[0:1, :] = px_new
    out_ref[1:2, :] = py_new
    out_ref[2:3, :] = cos_new
    out_ref[3:4, :] = sin_new
    out_ref[4:5, :] = v_new


def _round_up(n, m):
    return ((n + m - 1) // m) * m


def kbicycle_dx(x, u):
    """Pallas equivalent of KBicycleDx.forward.

    x: (B, 5) or (5,) float32, u: (B, 2) or (2,) float32. Returns same shape as x.
    """
    squeeze = x.ndim == 1
    if squeeze:
        x = x[None, :]
        u = u[None, :]
    x = x.astype(jnp.float32)
    u = u.astype(jnp.float32)
    b = x.shape[0]

    tile = min(MAX_TILE, _round_up(b, 128))
    b_pad = _round_up(b, tile)

    # (feature, batch) lane-dense layout; pad batch up to a tile multiple.
    xt = jnp.pad(x.T, ((0, 0), (0, b_pad - b)))
    ut = jnp.pad(u.T, ((0, 0), (0, b_pad - b)))

    out_t = pl.pallas_call(
        _kbicycle_kernel,
        out_shape=jax.ShapeDtypeStruct((N_STATE, b_pad), jnp.float32),
        grid_spec=pltpu.PrefetchScalarGridSpec(
            num_scalar_prefetch=0,
            grid=(b_pad // tile,),
            in_specs=[
                pl.BlockSpec((N_STATE, tile), lambda i: (0, i)),
                pl.BlockSpec((N_CTRL, tile), lambda i: (0, i)),
            ],
            out_specs=pl.BlockSpec((N_STATE, tile), lambda i: (0, i)),
        ),
        compiler_params=pltpu.CompilerParams(
            dimension_semantics=("parallel",)),
        input_output_aliases={0: 0},   # reuse the state buffer for the output
    )(xt, ut)

    out = out_t[:, :b].T
    if squeeze:
        out = out[0]
    return out


def _reference(x, u):
    # Pure-JAX reference mirroring the PyTorch forward exactly.
    a, steer = u[:, 0], u[:, 1]
    px, py, cos_th, sin_th, v = (x[:, i] for i in range(5))
    theta = jnp.arctan2(sin_th, cos_th)
    px = px + v * jnp.cos(theta) * DT
    py = py + v * jnp.sin(theta) * DT
    theta = theta + v * jnp.tan(steer) / L * DT
    v = v + a * DT
    return jnp.stack((px, py, jnp.cos(theta), jnp.sin(theta), v), axis=1)


if __name__ == "__main__":
    key = jax.random.PRNGKey(0)
    k1, k2, k3, k4, k5 = jax.random.split(key, 5)
    B = 2

    # Physically-consistent state: [px, py, cos(theta), sin(theta), v].
    pos = jax.random.normal(k1, (B, 2), dtype=jnp.float32) * 2.0
    theta0 = jax.random.uniform(k2, (B,), dtype=jnp.float32,
                                minval=-np.pi, maxval=np.pi)
    v0 = jax.random.uniform(k3, (B,), dtype=jnp.float32, minval=-1.0, maxval=3.0)
    x = jnp.concatenate(
        [pos, jnp.cos(theta0)[:, None], jnp.sin(theta0)[:, None], v0[:, None]],
        axis=1,
    )

    accel = jax.random.uniform(k4, (B,), dtype=jnp.float32, minval=-2.0, maxval=2.0)
    steer = jax.random.uniform(k5, (B,), dtype=jnp.float32,
                               minval=-np.pi / 4, maxval=np.pi / 4)
    u = jnp.stack([accel, steer], axis=1)

    out = kbicycle_dx(x, u)
    out = jax.block_until_ready(out)

    ref = _reference(x, u)
    np.testing.assert_allclose(np.asarray(out), np.asarray(ref),
                               rtol=1e-5, atol=1e-5)

    print("KERNEL_OK")
</pallas_src>

<mosaic_0001>
module attributes {stable_mosaic.version = 11 : i64} {
  func.func @_kbicycle_kernel(%arg0: i32, %arg1: memref<5x128xf32, #tpu.memory_space<vmem>>, %arg2: memref<2x128xf32, #tpu.memory_space<vmem>>, %arg3: memref<5x128xf32, #tpu.memory_space<vmem>>) attributes {dimension_semantics = [#tpu.dimension_semantics<parallel>], iteration_bounds = array<i64: 1>, scalar_prefetch = 0 : i64, scratch_operands = 0 : i64, tpu.core_type = #tpu.core_type<tc>, window_params = [{transform_indices = @transform_0, window_bounds = array<i64: 5, 128>}, {transform_indices = @transform_1, window_bounds = array<i64: 2, 128>}, {transform_indices = @transform_2, window_bounds = array<i64: 5, 128>}]} {
    %c0 = arith.constant 0 : index
    %c0_0 = arith.constant 0 : index
    %0 = vector.load %arg1[%c0, %c0_0] : memref<5x128xf32, #tpu.memory_space<vmem>>, vector<1x128xf32>
    %c1 = arith.constant 1 : index
    %c0_1 = arith.constant 0 : index
    %1 = vector.load %arg1[%c1, %c0_1] : memref<5x128xf32, #tpu.memory_space<vmem>>, vector<1x128xf32>
    %c2 = arith.constant 2 : index
    %c0_2 = arith.constant 0 : index
    %2 = vector.load %arg1[%c2, %c0_2] : memref<5x128xf32, #tpu.memory_space<vmem>>, vector<1x128xf32>
    %c3 = arith.constant 3 : index
    %c0_3 = arith.constant 0 : index
    %3 = vector.load %arg1[%c3, %c0_3] : memref<5x128xf32, #tpu.memory_space<vmem>>, vector<1x128xf32>
    %c4 = arith.constant 4 : index
    %c0_4 = arith.constant 0 : index
    %4 = vector.load %arg1[%c4, %c0_4] : memref<5x128xf32, #tpu.memory_space<vmem>>, vector<1x128xf32>
    %c0_5 = arith.constant 0 : index
    %c0_6 = arith.constant 0 : index
    %5 = vector.load %arg2[%c0_5, %c0_6] : memref<2x128xf32, #tpu.memory_space<vmem>>, vector<1x128xf32>
    %c1_7 = arith.constant 1 : index
    %c0_8 = arith.constant 0 : index
    %6 = vector.load %arg2[%c1_7, %c0_8] : memref<2x128xf32, #tpu.memory_space<vmem>>, vector<1x128xf32>
    %7 = arith.mulf %2, %2 : vector<1x128xf32>
    %8 = arith.mulf %3, %3 : vector<1x128xf32>
    %9 = arith.addf %7, %8 : vector<1x128xf32>
    %cst = arith.constant 1.000000e-30 : f32
    %10 = vector.broadcast %cst : f32 to vector<1x128xf32>
    %11 = arith.maximumf %9, %10 : vector<1x128xf32>
    %12 = math.sqrt %11 : vector<1x128xf32>
    %cst_9 = arith.constant 1.000000e+00 : f32
    %13 = vector.broadcast %cst_9 : f32 to vector<1x128xf32>
    %14 = arith.divf %13, %12 : vector<1x128xf32>
    %15 = arith.mulf %2, %14 : vector<1x128xf32>
    %16 = arith.mulf %3, %14 : vector<1x128xf32>
    %cst_10 = arith.constant 5.000000e-02 : f32
    %17 = vector.broadcast %cst_10 : f32 to vector<1x128xf32>
    %18 = arith.mulf %4, %17 : vector<1x128xf32>
    %19 = arith.mulf %18, %15 : vector<1x128xf32>
    %20 = arith.addf %0, %19 : vector<1x128xf32>
    %21 = arith.mulf %18, %16 : vector<1x128xf32>
    %22 = arith.addf %1, %21 : vector<1x128xf32>
    %23 = math.sin %6 : vector<1x128xf32>
    %24 = math.cos %6 : vector<1x128xf32>
    %25 = arith.divf %23, %24 : vector<1x128xf32>
    %26 = arith.mulf %4, %25 : vector<1x128xf32>
    %cst_11 = arith.constant 0.0166666675 : f32
    %27 = vector.broadcast %cst_11 : f32 to vector<1x128xf32>
    %28 = arith.mulf %26, %27 : vector<1x128xf32>
    %29 = math.cos %28 : vector<1x128xf32>
    %30 = math.sin %28 : vector<1x128xf32>
    %31 = arith.mulf %15, %29 : vector<1x128xf32>
    %32 = arith.mulf %16, %30 : vector<1x128xf32>
    %33 = arith.subf %31, %32 : vector<1x128xf32>
    %34 = arith.mulf %16, %29 : vector<1x128xf32>
    %35 = arith.mulf %15, %30 : vector<1x128xf32>
    %36 = arith.addf %34, %35 : vector<1x128xf32>
    %cst_12 = arith.constant 5.000000e-02 : f32
    %37 = vector.broadcast %cst_12 : f32 to vector<1x128xf32>
    %38 = arith.mulf %5, %37 : vector<1x128xf32>
    %39 = arith.addf %4, %38 : vector<1x128xf32>
    %c0_13 = arith.constant 0 : index
    %c0_14 = arith.constant 0 : index
    %40 = vector.load %arg3[%c0_13, %c0_14] : memref<5x128xf32, #tpu.memory_space<vmem>>, vector<1x128xf32>
    tpu.vector_store %arg3[%c0_13, %c0_14], %20 {strides = array<i32>} : memref<5x128xf32, #tpu.memory_space<vmem>>, vector<1x128xf32>,
    %c1_15 = arith.constant 1 : index
    %c0_16 = arith.constant 0 : index
    %41 = vector.load %arg3[%c1_15, %c0_16] : memref<5x128xf32, #tpu.memory_space<vmem>>, vector<1x128xf32>
    tpu.vector_store %arg3[%c1_15, %c0_16], %22 {strides = array<i32>} : memref<5x128xf32, #tpu.memory_space<vmem>>, vector<1x128xf32>,
    %c2_17 = arith.constant 2 : index
    %c0_18 = arith.constant 0 : index
    %42 = vector.load %arg3[%c2_17, %c0_18] : memref<5x128xf32, #tpu.memory_space<vmem>>, vector<1x128xf32>
    tpu.vector_store %arg3[%c2_17, %c0_18], %33 {strides = array<i32>} : memref<5x128xf32, #tpu.memory_space<vmem>>, vector<1x128xf32>,
    %c3_19 = arith.constant 3 : index
    %c0_20 = arith.constant 0 : index
    %43 = vector.load %arg3[%c3_19, %c0_20] : memref<5x128xf32, #tpu.memory_space<vmem>>, vector<1x128xf32>
    tpu.vector_store %arg3[%c3_19, %c0_20], %36 {strides = array<i32>} : memref<5x128xf32, #tpu.memory_space<vmem>>, vector<1x128xf32>,
    %c4_21 = arith.constant 4 : index
    %c0_22 = arith.constant 0 : index
    %44 = vector.load %arg3[%c4_21, %c0_22] : memref<5x128xf32, #tpu.memory_space<vmem>>, vector<1x128xf32>
    tpu.vector_store %arg3[%c4_21, %c0_22], %39 {strides = array<i32>} : memref<5x128xf32, #tpu.memory_space<vmem>>, vector<1x128xf32>,
    return
  }
  func.func @transform_0(%arg0: i32) -> (i32, i32) {
    %c0_i32 = arith.constant 0 : i32
    %c0_i32_0 = arith.constant 0 : i32
    return %c0_i32, %arg0 : i32, i32
  }
  func.func @transform_1(%arg0: i32) -> (i32, i32) {
    %c0_i32 = arith.constant 0 : i32
    %c0_i32_0 = arith.constant 0 : i32
    return %c0_i32, %arg0 : i32, i32
  }
  func.func @transform_2(%arg0: i32) -> (i32, i32) {
    %c0_i32 = arith.constant 0 : i32
    %c0_i32_0 = arith.constant 0 : i32
    return %c0_i32, %arg0 : i32, i32
  }
}

</mosaic_0001>

<llo_original>
// kernel: tpu_custom_call.1
$region0: #{tpu_custom_call.1}
  #allocation0 [shape = 'u32[]', space=smem, size = 0x4, offset = 0x4, fixed_abs, tag = 'smem constant byte address 0x4 - core index']
  #allocation1 [shape = 'u32[144,128]{1,0:T(1,128)}', space=vmem, size = 0x12000, scoped, tag = 'internal scratch']
  %s0 = inlined_call_operand.hbm [shape: f32[5,128], index: 0, kind: input, shape index: {}, may-alias: {0,2}]
  %s1 = inlined_call_operand.vmem [shape: f32[2,128], index: 1, kind: input, shape index: {}]
  %s2 = inlined_call_operand.hbm [shape: f32[5,128], index: 2, kind: output, shape index: {}, may-alias: {0,2}]
  %s3 = sld [smem:[#allocation0]]
  $region22: #{tpu_custom_call.1} parent=0
    _
  %s5 = ssub.s32 1, %s3
  %s6 = scalar_select 0, %s5, %s3
  $region1: #{tpu_custom_call.1} parent=0
    #allocation2 [shape = 'u8[4096]{0}', space=vmem, size = 0x1000, scoped, tag = 'input window, operand 0, single buffered']
    #allocation3 [shape = 's32[1]{0}', space=sflag, size = 0x4, scoped, tag = 'scoped memory for tpu_custom_call.1']
    #allocation4 [shape = 's32[1]{0}', space=sflag, size = 0x4, scoped, tag = 'scoped memory for tpu_custom_call.1']
    #allocation5 [shape = 'u8[4096]{0}', space=vmem, size = 0x1000, scoped, tag = 'output window, operand 0, single buffered']
    %7 = vsyncpa [#allocation3], 0
    %8 = vsyncpa [#allocation4], 0
    // Predicated region
    $region2: #{tpu_custom_call.1} parent=1 // pred_check
      _
    $region3: #{tpu_custom_call.1} parent=1 // pred_check_branch
      %10 = sbr.rel (0) target = $region5
    $region4: #{tpu_custom_call.1} parent=1 // pred_region
      %s12 = ssub.s32 128, 128
      %13 = vsyncadd [#allocation3], %s12
      %s15 = sshll.u32 [#allocation2], 4
      %s16 = int_to_ptr.vmem [resolvable:$true] %s15
      %18 = dma.hbm_to_vmem [thread:$0]  %s0, 128, %s16, [#allocation3]
    $region5: #{tpu_custom_call.1} parent=1 // pred_fallthru
      _
    // Predicated region
    $region6: #{tpu_custom_call.1} parent=1 // pred_check
      _
    $region7: #{tpu_custom_call.1} parent=1 // pred_check_branch
      %20 = sbr.rel (0) target = $region9
    $region8: #{tpu_custom_call.1} parent=1 // pred_region
      _
    $region9: #{tpu_custom_call.1} parent=1 // pred_fallthru
      _
    // Predicated region
    $region10: #{tpu_custom_call.1} parent=1 // pred_check
      _
    $region11: #{tpu_custom_call.1} parent=1 // pred_check_branch
      %22 = sbr.rel (0) target = $region13
    $region12: #{tpu_custom_call.1} parent=1 // pred_region
      %23 = dma.done [#allocation3], 128
    $region13: #{tpu_custom_call.1} parent=1 // pred_fallthru
      _
    %v24 = vld [vmem:[#allocation2] sm:$0x1]
    %v25 = vld [vmem:[#allocation2 + $0x1] sm:$0x1]
    %v26 = vld [vmem:[#allocation2 + $0x2] sm:$0x1]
    %v27 = vld [vmem:[#allocation2 + $0x3] sm:$0x1]
    %v28 = vld [vmem:[#allocation2 + $0x4] sm:$0x1]
    %v29 = vld [vmem:[%s1] sm:$0x1]
    %v30 = vld [vmem:[%s1 + $0x1] sm:$0x1]
    %v31 = vmul.f32 %v26, %v26
    %v32 = vmul.f32 %v27, %v27
    %v33 = vadd.f32 %v31, %v32
    %v34 = vmax.f32 %v33, 1e-30
    %v35 = vrsqrt.pop %v34
    %v36 = vmul.f32 %v34, %v35
    %vm37 = vcmp.eq.f32.partialorder %v34, inf
    %v38 = vsel %vm37, %v34, %v36
    %vm39 = vcmp.eq.f32.partialorder %v34, 0.0
    %v40 = vand.u32 %v34, 2147483648
    %v41 = vsel %vm39, %v40, %v38
    %v42 = vrcp.pop %v41
    %v43 = vmul.f32 1.0, %v42
    %v44 = vmul.f32 %v26, %v43
    %v45 = vmul.f32 %v27, %v43
    %v46 = vmul.f32 %v28, 0.05
    %v47 = vmul.f32 %v46, %v44
    %v48 = vadd.f32 %v24, %v47
    %v49 = vmul.f32 %v46, %v45
    %v50 = vadd.f32 %v25, %v49
    %v51 = vand.u32 2147483647, %v30
    %vm52 = vcmp.le.f32.partialorder %v51, 0.7853982
    %vm53 = vcmp.lt.s32.totalorder %v30, 0
    %v54 = vand.u32 %v30, 2139095040
    %v55 = vshrl.u32 %v54, 23
    %v56 = vsub.s32 %v55, 127
    %v57 = vand.u32 2147483647, %v30
    %v58 = vand.u32 %v57, 8388607
    %v59 = vor.u32 %v58, 8388608
    %v60 = vsub.s32 0, %v59
    %v61 = vadd.s32 %v56, 1
    %vm62 = vcmp.gt.s32.totalorder %v61, 0
    %v63 = vsel %vm62, %v61, 0
    %v64 = vshrl.u32 %v63, 5
    %v65 = vand.u32 %v63, 31
    %v66 = vsub.s32 32, %v65
    %v67 = vshrl.u32 683565275, %v66
    %v68 = vshll.u32 683565275, %v65
    %v69 = vshrl.u32 2475754826, %v66
    %v70 = vor.u32 %v68, %v69
    %v71 = vshll.u32 2475754826, %v65
    %v72 = vshrl.u32 2131351028, %v66
    %v73 = vor.u32 %v71, %v72
    %v74 = vshll.u32 2131351028, %v65
    %v75 = vshrl.u32 2102212464, %v66
    %v76 = vor.u32 %v74, %v75
    %v77 = vshll.u32 2102212464, %v65
    %v78 = vshrl.u32 920167782, %v66
    %v79 = vor.u32 %v77, %v78
    %v80 = vshll.u32 920167782, %v65
    %v81 = vshrl.u32 1326507024, %v66
    %v82 = vor.u32 %v80, %v81
    %vm83 = vcmp.lt.s32.totalorder %v64, 1
    %vm84 = vcmp.lt.s32.totalorder %v64, 2
    %vm85 = vcmp.lt.s32.totalorder %v64, 3
    %vm86 = vcmp.lt.s32.totalorder %v64, 4
    %v87 = vsel %vm83, %v67, %v70
    %v88 = vsel %vm86, %v76, 2102212464
    %v89 = vsel %vm85, %v73, %v88
    %v90 = vsel %vm84, %v87, %v89
    %v91 = vsel %vm83, %v70, %v73
    %v92 = vsel %vm86, %v79, 920167782
    %v93 = vsel %vm85, %v76, %v92
    %v94 = vsel %vm84, %v91, %v93
    %v95 = vsel %vm83, %v73, %v76
    %v96 = vsel %vm86, %v82, 1326507024
    %v97 = vsel %vm85, %v79, %v96
    %v98 = vsel %vm84, %v95, %v97
    %v99 = vshll.u32 %v59, 8
    %v100 = vmul.u32.u64.compose %v99, %v98
    %v101 = vextract.low.u32 %v100
    %v102 = vextract.high.u32 %v100
    %v103 = vmul.u32.u64.compose %v99, %v94
    %v104 = vextract.low.u32 %v103
    %v105 = vextract.high.u32 %v103
    %v106 = vmul.u32 %v99, %v90
    %v107 = vadd.s32 %v102, %v104
    %vm108 = vc.u32 %v102, %v104
    %v109 = vadd.s32 %v105, 1
    %v110 = vsel %vm108, %v109, %v105
    %v111 = vadd.s32 %v106, %v110
    %v112 = vadd.s32 %v111, 536870912
    %v113 = vshrl.u32 %v112, 30
    %v114 = vshll.u32 %v113, 30
    %v115 = vsub.s32 %v111, %v114
    %vm116 = vcmp.lt.s32.totalorder %v115, 0
    %v117 = vsub.s32 0, %v115
    %v118 = vsel %vm116, %v117, %v115
    %v119 = vclz %v118
    %v120 = vsub.s32 %v119, 2
    %vm121 = vcmp.gt.s32.totalorder 0, %v120
    %v122 = vsel %vm121, 0, %v120
    %v123 = vsub.s32 32, %v122
    %v124 = vshll.u32 %v115, %v122
    %v125 = vshrl.u32 %v107, %v123
    %v126 = vor.u32 %v124, %v125
    %v127 = vsub.s32 4294967266, %v122
    %v128 = vadd.s32 %v127, 127
    %v129 = vshll.u32 %v128, 23
    %v130 = vor.u32 4788187, %v129
    %v131 = vand.u32 2147483647, %v130
    %v133 = vcvt.s32.f32 %v126
    %v134 = vmul.f32 %v133, %v131
    %v135 = vxor.u32 %v134, 2147483648
    %v136 = vsel %vm53, %v135, %v134
    %v137 = vsub.s32 4, %v113
    %v138 = vsel %vm53, %v137, %v113
    %v139 = vsel %vm52, %v30, %v136
    %v140 = vsel %vm52, 0, %v138
    %v141 = vcosq.f32.pop %v139
    %v142 = vsinq.f32.pop %v139
    %vm143 = vweird.f32 %v30
    %v144 = vadd.s32 %v140, 3
    %v145 = vand.u32 %v144, 3
    %vm146 = vcmp.lt.s32.totalorder %v145, 2
    %vm147 = vcmp.eq.s32.totalorder %v145, 0
    %v148 = vxor.u32 %v142, 2147483648
    %v149 = vsel %vm147, %v141, %v148
    %vm150 = vcmp.eq.s32.totalorder %v145, 2
    %v151 = vxor.u32 %v141, 2147483648
    %v152 = vsel %vm150, %v151, %v142
    %v153 = vsel %vm146, %v149, %v152
    %v154 = vsel %vm143, nan, %v153
    %v155 = vand.u32 2147483647, %v30
    %vm156 = vcmp.le.f32.partialorder %v155, 0.7853982
    %vm157 = vcmp.lt.s32.totalorder %v30, 0
    %v158 = vand.u32 %v30, 2139095040
    %v159 = vshrl.u32 %v158, 23
    %v160 = vsub.s32 %v159, 127
    %v161 = vand.u32 2147483647, %v30
    %v162 = vand.u32 %v161, 8388607
    %v163 = vor.u32 %v162, 8388608
    %v164 = vsub.s32 0, %v163
    %v165 = vadd.s32 %v160, 1
    %vm166 = vcmp.gt.s32.totalorder %v165, 0
    %v167 = vsel %vm166, %v165, 0
    %v168 = vshrl.u32 %v167, 5
    %v169 = vand.u32 %v167, 31
    %v170 = vsub.s32 32, %v169
    %v171 = vshrl.u32 683565275, %v170
    %v172 = vshll.u32 683565275, %v169
    %v173 = vshrl.u32 2475754826, %v170
    %v174 = vor.u32 %v172, %v173
    %v175 = vshll.u32 2475754826, %v169
    %v176 = vshrl.u32 2131351028, %v170
    %v177 = vor.u32 %v175, %v176
    %v178 = vshll.u32 2131351028, %v169
    %v179 = vshrl.u32 2102212464, %v170
    %v180 = vor.u32 %v178, %v179
    %v181 = vshll.u32 2102212464, %v169
    %v182 = vshrl.u32 920167782, %v170
    %v183 = vor.u32 %v181, %v182
    %v184 = vshll.u32 920167782, %v169
    %v185 = vshrl.u32 1326507024, %v170
    %v186 = vor.u32 %v184, %v185
    %vm187 = vcmp.lt.s32.totalorder %v168, 1
    %vm188 = vcmp.lt.s32.totalorder %v168, 2
    %vm189 = vcmp.lt.s32.totalorder %v168, 3
    %vm190 = vcmp.lt.s32.totalorder %v168, 4
    %v191 = vsel %vm187, %v171, %v174
    %v192 = vsel %vm190, %v180, 2102212464
    %v193 = vsel %vm189, %v177, %v192
    %v194 = vsel %vm188, %v191, %v193
    %v195 = vsel %vm187, %v174, %v177
    %v196 = vsel %vm190, %v183, 920167782
    %v197 = vsel %vm189, %v180, %v196
    %v198 = vsel %vm188, %v195, %v197
    %v199 = vsel %vm187, %v177, %v180
    %v200 = vsel %vm190, %v186, 1326507024
    %v201 = vsel %vm189, %v183, %v200
    %v202 = vsel %vm188, %v199, %v201
    %v203 = vshll.u32 %v163, 8
    %v204 = vmul.u32.u64.compose %v203, %v202
    %v205 = vextract.low.u32 %v204
    %v206 = vextract.high.u32 %v204
    %v207 = vmul.u32.u64.compose %v203, %v198
    %v208 = vextract.low.u32 %v207
    %v209 = vextract.high.u32 %v207
    %v210 = vmul.u32 %v203, %v194
    %v211 = vadd.s32 %v206, %v208
    %vm212 = vc.u32 %v206, %v208
    %v213 = vadd.s32 %v209, 1
    %v214 = vsel %vm212, %v213, %v209
    %v215 = vadd.s32 %v210, %v214
    %v216 = vadd.s32 %v215, 536870912
    %v217 = vshrl.u32 %v216, 30
    %v218 = vshll.u32 %v217, 30
    %v219 = vsub.s32 %v215, %v218
    %vm220 = vcmp.lt.s32.totalorder %v219, 0
    %v221 = vsub.s32 0, %v219
    %v222 = vsel %vm220, %v221, %v219
    %v223 = vclz %v222
    %v224 = vsub.s32 %v223, 2
    %vm225 = vcmp.gt.s32.totalorder 0, %v224
    %v226 = vsel %vm225, 0, %v224
    %v227 = vsub.s32 32, %v226
    %v228 = vshll.u32 %v219, %v226
    %v229 = vshrl.u32 %v211, %v227
    %v230 = vor.u32 %v228, %v229
    %v231 = vsub.s32 4294967266, %v226
    %v232 = vadd.s32 %v231, 127
    %v233 = vshll.u32 %v232, 23
    %v234 = vor.u32 4788187, %v233
    %v235 = vand.u32 2147483647, %v234
    %v237 = vcvt.s32.f32 %v230
    %v238 = vmul.f32 %v237, %v235
    %v239 = vxor.u32 %v238, 2147483648
    %v240 = vsel %vm157, %v239, %v238
    %v241 = vsub.s32 4, %v217
    %v242 = vsel %vm157, %v241, %v217
    %v243 = vsel %vm156, %v30, %v240
    %v244 = vsel %vm156, 0, %v242
    %v245 = vcosq.f32.pop %v243
    %v246 = vsinq.f32.pop %v243
    %vm247 = vweird.f32 %v30
    %v248 = vand.u32 %v244, 3
    %vm249 = vcmp.lt.s32.totalorder %v248, 2
    %vm250 = vcmp.eq.s32.totalorder %v248, 0
    %v251 = vxor.u32 %v246, 2147483648
    %v252 = vsel %vm250, %v245, %v251
    %vm253 = vcmp.eq.s32.totalorder %v248, 2
    %v254 = vxor.u32 %v245, 2147483648
    %v255 = vsel %vm253, %v254, %v246
    %v256 = vsel %vm249, %v252, %v255
    %v257 = vsel %vm247, nan, %v256
    %v258 = vrcp.pop %v257
    %v259 = vmul.f32 %v154, %v258
    %v260 = vmul.f32 %v28, %v259
    %v261 = vmul.f32 %v260, 0.016666668
    %v262 = vand.u32 2147483647, %v261
    %vm263 = vcmp.le.f32.partialorder %v262, 0.7853982
    %vm264 = vcmp.lt.s32.totalorder %v261, 0
    %v265 = vand.u32 %v261, 2139095040
    %v266 = vshrl.u32 %v265, 23
    %v267 = vsub.s32 %v266, 127
    %v268 = vand.u32 2147483647, %v261
    %v269 = vand.u32 %v268, 8388607
    %v270 = vor.u32 %v269, 8388608
    %v271 = vsub.s32 0, %v270
    %v272 = vadd.s32 %v267, 1
    %vm273 = vcmp.gt.s32.totalorder %v272, 0
    %v274 = vsel %vm273, %v272, 0
    %v275 = vshrl.u32 %v274, 5
    %v276 = vand.u32 %v274, 31
    %v277 = vsub.s32 32, %v276
    %v278 = vshrl.u32 683565275, %v277
    %v279 = vshll.u32 683565275, %v276
    %v280 = vshrl.u32 2475754826, %v277
    %v281 = vor.u32 %v279, %v280
    %v282 = vshll.u32 2475754826, %v276
    %v283 = vshrl.u32 2131351028, %v277
    %v284 = vor.u32 %v282, %v283
    %v285 = vshll.u32 2131351028, %v276
    %v286 = vshrl.u32 2102212464, %v277
    %v287 = vor.u32 %v285, %v286
    %v288 = vshll.u32 2102212464, %v276
    %v289 = vshrl.u32 920167782, %v277
    %v290 = vor.u32 %v288, %v289
    %v291 = vshll.u32 920167782, %v276
    %v292 = vshrl.u32 1326507024, %v277
    %v293 = vor.u32 %v291, %v292
    %vm294 = vcmp.lt.s32.totalorder %v275, 1
    %vm295 = vcmp.lt.s32.totalorder %v275, 2
    %vm296 = vcmp.lt.s32.totalorder %v275, 3
    %vm297 = vcmp.lt.s32.totalorder %v275, 4
    %v298 = vsel %vm294, %v278, %v281
    %v299 = vsel %vm297, %v287, 2102212464
    %v300 = vsel %vm296, %v284, %v299
    %v301 = vsel %vm295, %v298, %v300
    %v302 = vsel %vm294, %v281, %v284
    %v303 = vsel %vm297, %v290, 920167782
    %v304 = vsel %vm296, %v287, %v303
    %v305 = vsel %vm295, %v302, %v304
    %v306 = vsel %vm294, %v284, %v287
    %v307 = vsel %vm297, %v293, 1326507024
    %v308 = vsel %vm296, %v290, %v307
    %v309 = vsel %vm295, %v306, %v308
    %v310 = vshll.u32 %v270, 8
    %v311 = vmul.u32.u64.compose %v310, %v309
    %v312 = vextract.low.u32 %v311
    %v313 = vextract.high.u32 %v311
    %v314 = vmul.u32.u64.compose %v310, %v305
    %v315 = vextract.low.u32 %v314
    %v316 = vextract.high.u32 %v314
    %v317 = vmul.u32 %v310, %v301
    %v318 = vadd.s32 %v313, %v315
    %vm319 = vc.u32 %v313, %v315
    %v320 = vadd.s32 %v316, 1
    %v321 = vsel %vm319, %v320, %v316
    %v322 = vadd.s32 %v317, %v321
    %v323 = vadd.s32 %v322, 536870912
    %v324 = vshrl.u32 %v323, 30
    %v325 = vshll.u32 %v324, 30
    %v326 = vsub.s32 %v322, %v325
    %vm327 = vcmp.lt.s32.totalorder %v326, 0
    %v328 = vsub.s32 0, %v326
    %v329 = vsel %vm327, %v328, %v326
    %v330 = vclz %v329
    %v331 = vsub.s32 %v330, 2
    %vm332 = vcmp.gt.s32.totalorder 0, %v331
    %v333 = vsel %vm332, 0, %v331
    %v334 = vsub.s32 32, %v333
    %v335 = vshll.u32 %v326, %v333
    %v336 = vshrl.u32 %v318, %v334
    %v337 = vor.u32 %v335, %v336
    %v338 = vsub.s32 4294967266, %v333
    %v339 = vadd.s32 %v338, 127
    %v340 = vshll.u32 %v339, 23
    %v341 = vor.u32 4788187, %v340
    %v342 = vand.u32 2147483647, %v341
    %v344 = vcvt.s32.f32 %v337
    %v345 = vmul.f32 %v344, %v342
    %v346 = vxor.u32 %v345, 2147483648
    %v347 = vsel %vm264, %v346, %v345
    %v348 = vsub.s32 4, %v324
    %v349 = vsel %vm264, %v348, %v324
    %v350 = vsel %vm263, %v261, %v347
    %v351 = vsel %vm263, 0, %v349
    %v352 = vcosq.f32.pop %v350
    %v353 = vsinq.f32.pop %v350
    %vm354 = vweird.f32 %v261
    %v355 = vand.u32 %v351, 3
    %vm356 = vcmp.lt.s32.totalorder %v355, 2
    %vm357 = vcmp.eq.s32.totalorder %v355, 0
    %v358 = vxor.u32 %v353, 2147483648
    %v359 = vsel %vm357, %v352, %v358
    %vm360 = vcmp.eq.s32.totalorder %v355, 2
    %v361 = vxor.u32 %v352, 2147483648
    %v362 = vsel %vm360, %v361, %v353
    %v363 = vsel %vm356, %v359, %v362
    %v364 = vsel %vm354, nan, %v363
    %v365 = vand.u32 2147483647, %v261
    %vm366 = vcmp.le.f32.partialorder %v365, 0.7853982
    %vm367 = vcmp.lt.s32.totalorder %v261, 0
    %v368 = vand.u32 %v261, 2139095040
    %v369 = vshrl.u32 %v368, 23
    %v370 = vsub.s32 %v369, 127
    %v371 = vand.u32 2147483647, %v261
    %v372 = vand.u32 %v371, 8388607
    %v373 = vor.u32 %v372, 8388608
    %v374 = vsub.s32 0, %v373
    %v375 = vadd.s32 %v370, 1
    %vm376 = vcmp.gt.s32.totalorder %v375, 0
    %v377 = vsel %vm376, %v375, 0
    %v378 = vshrl.u32 %v377, 5
    %v379 = vand.u32 %v377, 31
    %v380 = vsub.s32 32, %v379
    %v381 = vshrl.u32 683565275, %v380
    %v382 = vshll.u32 683565275, %v379
    %v383 = vshrl.u32 2475754826, %v380
    %v384 = vor.u32 %v382, %v383
    %v385 = vshll.u32 2475754826, %v379
    %v386 = vshrl.u32 2131351028, %v380
    %v387 = vor.u32 %v385, %v386
    %v388 = vshll.u32 2131351028, %v379
    %v389 = vshrl.u32 2102212464, %v380
    %v390 = vor.u32 %v388, %v389
    %v391 = vshll.u32 2102212464, %v379
    %v392 = vshrl.u32 920167782, %v380
    %v393 = vor.u32 %v391, %v392
    %v394 = vshll.u32 920167782, %v379
    %v395 = vshrl.u32 1326507024, %v380
    %v396 = vor.u32 %v394, %v395
    %vm397 = vcmp.lt.s32.totalorder %v378, 1
    %vm398 = vcmp.lt.s32.totalorder %v378, 2
    %vm399 = vcmp.lt.s32.totalorder %v378, 3
    %vm400 = vcmp.lt.s32.totalorder %v378, 4
    %v401 = vsel %vm397, %v381, %v384
    %v402 = vsel %vm400, %v390, 2102212464
    %v403 = vsel %vm399, %v387, %v402
    %v404 = vsel %vm398, %v401, %v403
    %v405 = vsel %vm397, %v384, %v387
    %v406 = vsel %vm400, %v393, 920167782
    %v407 = vsel %vm399, %v390, %v406
    %v408 = vsel %vm398, %v405, %v407
    %v409 = vsel %vm397, %v387, %v390
    %v410 = vsel %vm400, %v396, 1326507024
    %v411 = vsel %vm399, %v393, %v410
    %v412 = vsel %vm398, %v409, %v411
    %v413 = vshll.u32 %v373, 8
    %v414 = vmul.u32.u64.compose %v413, %v412
    %v415 = vextract.low.u32 %v414
    %v416 = vextract.high.u32 %v414
    %v417 = vmul.u32.u64.compose %v413, %v408
    %v418 = vextract.low.u32 %v417
    %v419 = vextract.high.u32 %v417
    %v420 = vmul.u32 %v413, %v404
    %v421 = vadd.s32 %v416, %v418
    %vm422 = vc.u32 %v416, %v418
    %v423 = vadd.s32 %v419, 1
    %v424 = vsel %vm422, %v423, %v419
    %v425 = vadd.s32 %v420, %v424
    %v426 = vadd.s32 %v425, 536870912
    %v427 = vshrl.u32 %v426, 30
    %v428 = vshll.u32 %v427, 30
    %v429 = vsub.s32 %v425, %v428
    %vm430 = vcmp.lt.s32.totalorder %v429, 0
    %v431 = vsub.s32 0, %v429
    %v432 = vsel %vm430, %v431, %v429
    %v433 = vclz %v432
    %v434 = vsub.s32 %v433, 2
    %vm435 = vcmp.gt.s32.totalorder 0, %v434
    %v436 = vsel %vm435, 0, %v434
    %v437 = vsub.s32 32, %v436
    %v438 = vshll.u32 %v429, %v436
    %v439 = vshrl.u32 %v421, %v437
    %v440 = vor.u32 %v438, %v439
    %v441 = vsub.s32 4294967266, %v436
    %v442 = vadd.s32 %v441, 127
    %v443 = vshll.u32 %v442, 23
    %v444 = vor.u32 4788187, %v443
    %v445 = vand.u32 2147483647, %v444
    %v447 = vcvt.s32.f32 %v440
    %v448 = vmul.f32 %v447, %v445
    %v449 = vxor.u32 %v448, 2147483648
    %v450 = vsel %vm367, %v449, %v448
    %v451 = vsub.s32 4, %v427
    %v452 = vsel %vm367, %v451, %v427
    %v453 = vsel %vm366, %v261, %v450
    %v454 = vsel %vm366, 0, %v452
    %v455 = vcosq.f32.pop %v453
    %v456 = vsinq.f32.pop %v453
    %vm457 = vweird.f32 %v261
    %v458 = vadd.s32 %v454, 3
    %v459 = vand.u32 %v458, 3
    %vm460 = vcmp.lt.s32.totalorder %v459, 2
    %vm461 = vcmp.eq.s32.totalorder %v459, 0
    %v462 = vxor.u32 %v456, 2147483648
    %v463 = vsel %vm461, %v455, %v462
    %vm464 = vcmp.eq.s32.totalorder %v459, 2
    %v465 = vxor.u32 %v455, 2147483648
    %v466 = vsel %vm464, %v465, %v456
    %v467 = vsel %vm460, %v463, %v466
    %v468 = vsel %vm457, nan, %v467
    %v469 = vmul.f32 %v44, %v364
    %v470 = vmul.f32 %v45, %v468
    %v471 = vsub.f32 %v469, %v470
    %v472 = vmul.f32 %v45, %v364
    %v473 = vmul.f32 %v44, %v468
    %v474 = vadd.f32 %v472, %v473
    %v475 = vmul.f32 %v29, 0.05
    %v476 = vadd.f32 %v28, %v475
    %477 = vst [vmem:[#allocation5] sm:$0x1] %v48
    %478 = vst [vmem:[#allocation5 + $0x1] sm:$0x1] %v50
    %479 = vst [vmem:[#allocation5 + $0x2] sm:$0x1] %v471
    %480 = vst [vmem:[#allocation5 + $0x3] sm:$0x1] %v474
    %481 = vst [vmem:[#allocation5 + $0x4] sm:$0x1] %v476
    // Predicated region
    $region14: #{tpu_custom_call.1} parent=1 // pred_check
      _
    $region15: #{tpu_custom_call.1} parent=1 // pred_check_branch
      %483 = sbr.rel (0) target = $region17
    $region16: #{tpu_custom_call.1} parent=1 // pred_region
      %s485 = ssub.s32 128, 128
      %486 = vsyncadd [#allocation4], %s485
      %s488 = sshll.u32 [#allocation5], 4
      %s489 = int_to_ptr.vmem [resolvable:$true] %s488
      %491 = dma.vmem_to_hbm [thread:$0]  %s489, 128, %s2, [#allocation4]
    $region17: #{tpu_custom_call.1} parent=1 // pred_fallthru
      _
    // Predicated region
    $region18: #{tpu_custom_call.1} parent=1 // pred_check
      _
    $region19: #{tpu_custom_call.1} parent=1 // pred_check_branch
      %493 = sbr.rel (0) target = $region21
    $region20: #{tpu_custom_call.1} parent=1 // pred_region
      %494 = dma.done [#allocation4], 128
    $region21: #{tpu_custom_call.1} parent=1 // pred_fallthru
      _
    %495 = vsyncpa [#allocation3], 1
    %496 = vsyncpa [#allocation4], 1

</llo_original>
